<compile_context>
chip_gen: v5e
topology: v5e:2x2
jax: 0.10.0
libtpu: 0.0.40
codegen_flags: <defaults>
</compile_context>

<pallas_src>
import functools

import jax
import jax.numpy as jnp
from jax import lax
from jax.experimental import pallas as pl
from jax.experimental.pallas import tpu as pltpu

LANE = 128            # TPU lane width (last dim of the kernel layout)
MAX_BLOCK_ROWS = 2048 # sublane rows per grid step (2048*128*4B = 1 MiB f32 block)


def _bce_dice_kernel(pred_ref, true_ref, out_ref,
                     nce_acc, int_acc, py_acc,
                     *, n_valid, n_class, block_rows, tail_rows):
    b = pl.program_id(1)
    t = pl.program_id(2)
    n_b = pl.num_programs(1)
    n_t = pl.num_programs(2)

    # Zero the per-class accumulators at the first tile of every class.
    @pl.when(jnp.logical_and(b == 0, t == 0))
    def _():
        nce_acc[...] = jnp.zeros_like(nce_acc)
        int_acc[...] = jnp.zeros_like(int_acc)
        py_acc[...] = jnp.zeros_like(py_acc)

    p = pred_ref[0, 0].astype(jnp.float32)   # (block_rows, LANE)
    y = true_ref[0, 0].astype(jnp.float32)

    def contributions():
        # Binary cross entropy, matching torch's log clamp at -100.
        log_p = jnp.maximum(jnp.log(p), -100.0)
        log_1mp = jnp.maximum(jnp.log(1.0 - p), -100.0)
        # ce = y*log_p + (1-y)*log_1mp  (<= 0);  BCE = -ce
        ce = log_1mp + y * (log_p - log_1mp)
        return ce, p * y, p + y

    def accumulate(ce, inter, psum):
        nce_acc[...] += ce
        int_acc[...] += inter
        py_acc[...] += psum

    if tail_rows == block_rows:
        # Block shape divides the row axis: mask-free everywhere.
        accumulate(*contributions())
    else:
        # Steady state (all but the last tile): mask-free.
        @pl.when(t < n_t - 1)
        def _():
            accumulate(*contributions())

        # Partial tail tile: rows >= tail_rows hold undefined data -> mask them.
        @pl.when(t == n_t - 1)
        def _():
            ce, inter, psum = contributions()
            row = lax.broadcasted_iota(jnp.int32, (block_rows, LANE), 0)
            m = row < tail_rows
            zero = jnp.zeros_like(ce)
            accumulate(jnp.where(m, ce, zero),
                       jnp.where(m, inter, zero),
                       jnp.where(m, psum, zero))

    # Finalize this class: fold BCE mean + (1 - DSC) and emit the per-class loss.
    @pl.when(jnp.logical_and(b == n_b - 1, t == n_t - 1))
    def _():
        smooth = 1.0
        bce_mean = -jnp.sum(nce_acc[...]) / float(n_valid)
        inter = jnp.sum(int_acc[...])
        denom = jnp.sum(py_acc[...])
        dsc = (2.0 * inter + smooth) / (denom + smooth)
        loss_c = bce_mean + (1.0 - dsc)
        out_ref[...] = jnp.broadcast_to(loss_c, out_ref.shape).astype(jnp.float32)


def bce_dice_loss(output, y_true, *, max_block_rows=MAX_BLOCK_ROWS):
    """output, y_true: [B, C, H, W] float arrays (probabilities / one-hot)."""
    B, C, H, W = output.shape
    n_hw = H * W
    pad = (-n_hw) % LANE
    m_rows = (n_hw + pad) // LANE

    def to_tiles(x):
        x = x.reshape(B, C, n_hw)                 # free view of NCHW
        if pad:
            # Zero padding contributes 0 to BCE / intersection / sums.
            x = jnp.pad(x, ((0, 0), (0, 0), (0, pad)))
        return x.reshape(B, C, m_rows, LANE)

    pred = to_tiles(output)
    true = to_tiles(y_true)

    if m_rows <= max_block_rows:
        block_rows = m_rows            # full-extent block: always legal, no tail
    else:
        block_rows = max_block_rows    # multiple of 8
    n_t = pl.cdiv(m_rows, block_rows)
    tail_rows = m_rows - (n_t - 1) * block_rows   # valid rows in the last tile

    # VMEM budget (block_rows=2048, f32): 2 in * 2 bufs * 1 MiB + 3 * 1 MiB acc
    # = 7 MiB, inside even v5e's 16 MiB default scoped VMEM.
    kernel = functools.partial(
        _bce_dice_kernel, n_valid=B * n_hw, n_class=C,
        block_rows=block_rows, tail_rows=tail_rows)

    per_class = pl.pallas_call(
        kernel,
        out_shape=jax.ShapeDtypeStruct((C, 8, LANE), jnp.float32),
        grid_spec=pltpu.PrefetchScalarGridSpec(
            num_scalar_prefetch=0,
            grid=(C, B, n_t),
            in_specs=[
                pl.BlockSpec((1, 1, block_rows, LANE), lambda c, b, t: (b, c, t, 0)),
                pl.BlockSpec((1, 1, block_rows, LANE), lambda c, b, t: (b, c, t, 0)),
            ],
            out_specs=pl.BlockSpec((1, 8, LANE), lambda c, b, t: (c, 0, 0)),
            scratch_shapes=[pltpu.VMEM((block_rows, LANE), jnp.float32)] * 3,
        ),
        compiler_params=pltpu.CompilerParams(
            dimension_semantics=("parallel", "arbitrary", "arbitrary")),
    )(pred, true)

    return jnp.mean(per_class[:, 0, 0])


def _reference(output, y_true):
    """Pure-JAX replica of the PyTorch forward (with torch's -100 log clamp)."""
    C = output.shape[1]
    smooth = 1.0
    total = 0.0
    for c in range(C):
        p = output[:, c].reshape(-1).astype(jnp.float32)
        y = y_true[:, c].reshape(-1).astype(jnp.float32)
        log_p = jnp.maximum(jnp.log(p), -100.0)
        log_1mp = jnp.maximum(jnp.log(1.0 - p), -100.0)
        bce = jnp.mean(-(y * log_p + (1.0 - y) * log_1mp))
        inter = jnp.sum(p * y)
        dsc = (2.0 * inter + smooth) / (jnp.sum(p) + jnp.sum(y) + smooth)
        total = total + bce + (1.0 - dsc)
    return total / C


if __name__ == "__main__":
    key = jax.random.PRNGKey(0)
    k1, k2, k3, k4 = jax.random.split(key, 4)

    # Main test: small NCHW shapes, probabilities in (0,1), binary targets.
    B, C, H, W = 2, 4, 16, 16
    output = jax.nn.sigmoid(jax.random.normal(k1, (B, C, H, W), jnp.float32))
    y_true = (jax.random.uniform(k2, (B, C, H, W)) > 0.5).astype(jnp.float32)

    loss = bce_dice_loss(output, y_true)
    jax.block_until_ready(loss)
    ref = _reference(output, y_true)
    assert jnp.allclose(loss, ref, rtol=1e-4, atol=1e-5), (loss, ref)

    # Secondary test: exercises the lane-pad (H*W % 128 != 0) and the masked
    # partial tail tile path (forced small block via max_block_rows).
    B2, C2, H2, W2 = 2, 3, 40, 40
    out2 = jax.nn.sigmoid(jax.random.normal(k3, (B2, C2, H2, W2), jnp.float32))
    y2 = (jax.random.uniform(k4, (B2, C2, H2, W2)) > 0.5).astype(jnp.float32)
    loss2 = bce_dice_loss(out2, y2, max_block_rows=8)
    jax.block_until_ready(loss2)
    ref2 = _reference(out2, y2)
    assert jnp.allclose(loss2, ref2, rtol=1e-4, atol=1e-5), (loss2, ref2)

    print("KERNEL_OK")
</pallas_src>

<mosaic_0001>
module attributes {stable_mosaic.version = 11 : i64} {
  func.func @_bce_dice_kernel(%arg0: i32, %arg1: i32, %arg2: i32, %arg3: memref<1x1x2x128xf32, #tpu.memory_space<vmem>>, %arg4: memref<1x1x2x128xf32, #tpu.memory_space<vmem>>, %arg5: memref<1x8x128xf32, #tpu.memory_space<vmem>>, %arg6: memref<2x128xf32, #tpu.memory_space<vmem>>, %arg7: memref<2x128xf32, #tpu.memory_space<vmem>>, %arg8: memref<2x128xf32, #tpu.memory_space<vmem>>) attributes {dimension_semantics = [#tpu.dimension_semantics<parallel>, #tpu.dimension_semantics<arbitrary>, #tpu.dimension_semantics<arbitrary>], iteration_bounds = array<i64: 4, 2, 1>, scalar_prefetch = 0 : i64, scratch_operands = 3 : i64, tpu.core_type = #tpu.core_type<tc>, window_params = [{transform_indices = @transform_0, window_bounds = array<i64: 1, 1, 2, 128>}, {transform_indices = @transform_1, window_bounds = array<i64: 1, 1, 2, 128>}, {transform_indices = @transform_2, window_bounds = array<i64: 1, 8, 128>}]} {
    %c0_i32 = arith.constant 0 : i32
    %0 = arith.cmpi eq, %arg1, %c0_i32 : i32
    %c0_i32_0 = arith.constant 0 : i32
    %1 = arith.cmpi eq, %arg2, %c0_i32_0 : i32
    %2 = arith.andi %0, %1 : i1
    %3 = arith.extui %2 : i1 to i32
    %c0_i32_1 = arith.constant 0 : i32
    %4 = arith.cmpi ne, %3, %c0_i32_1 : i32
    scf.if %4 {
      %cst_25 = arith.constant 0.000000e+00 : f32
      %36 = vector.broadcast %cst_25 : f32 to vector<2x128xf32>
      %c0_26 = arith.constant 0 : index
      %c0_27 = arith.constant 0 : index
      %37 = vector.load %arg6[%c0_26, %c0_27] : memref<2x128xf32, #tpu.memory_space<vmem>>, vector<2x128xf32>
      tpu.vector_store %arg6[%c0_26, %c0_27], %36 {strides = array<i32>} : memref<2x128xf32, #tpu.memory_space<vmem>>, vector<2x128xf32>,
      %cst_28 = arith.constant 0.000000e+00 : f32
      %38 = vector.broadcast %cst_28 : f32 to vector<2x128xf32>
      %c0_29 = arith.constant 0 : index
      %c0_30 = arith.constant 0 : index
      %39 = vector.load %arg7[%c0_29, %c0_30] : memref<2x128xf32, #tpu.memory_space<vmem>>, vector<2x128xf32>
      tpu.vector_store %arg7[%c0_29, %c0_30], %38 {strides = array<i32>} : memref<2x128xf32, #tpu.memory_space<vmem>>, vector<2x128xf32>,
      %cst_31 = arith.constant 0.000000e+00 : f32
      %40 = vector.broadcast %cst_31 : f32 to vector<2x128xf32>
      %c0_32 = arith.constant 0 : index
      %c0_33 = arith.constant 0 : index
      %41 = vector.load %arg8[%c0_32, %c0_33] : memref<2x128xf32, #tpu.memory_space<vmem>>, vector<2x128xf32>
      tpu.vector_store %arg8[%c0_32, %c0_33], %40 {strides = array<i32>} : memref<2x128xf32, #tpu.memory_space<vmem>>, vector<2x128xf32>,
    } else {
    }
    %c0 = arith.constant 0 : index
    %c0_2 = arith.constant 0 : index
    %c0_3 = arith.constant 0 : index
    %c0_4 = arith.constant 0 : index
    %5 = vector.load %arg3[%c0, %c0_2, %c0_3, %c0_4] : memref<1x1x2x128xf32, #tpu.memory_space<vmem>>, vector<1x1x2x128xf32>
    %6 = vector.shape_cast %5 : vector<1x1x2x128xf32> to vector<2x128xf32>
    %c0_5 = arith.constant 0 : index
    %c0_6 = arith.constant 0 : index
    %c0_7 = arith.constant 0 : index
    %c0_8 = arith.constant 0 : index
    %7 = vector.load %arg4[%c0_5, %c0_6, %c0_7, %c0_8] : memref<1x1x2x128xf32, #tpu.memory_space<vmem>>, vector<1x1x2x128xf32>
    %8 = vector.shape_cast %7 : vector<1x1x2x128xf32> to vector<2x128xf32>
    %9 = math.log %6 : vector<2x128xf32>
    %cst = arith.constant -1.000000e+02 : f32
    %10 = vector.broadcast %cst : f32 to vector<2x128xf32>
    %11 = arith.maximumf %9, %10 : vector<2x128xf32>
    %cst_9 = arith.constant 1.000000e+00 : f32
    %12 = vector.broadcast %cst_9 : f32 to vector<2x128xf32>
    %13 = arith.subf %12, %6 : vector<2x128xf32>
    %14 = math.log %13 : vector<2x128xf32>
    %cst_10 = arith.constant -1.000000e+02 : f32
    %15 = vector.broadcast %cst_10 : f32 to vector<2x128xf32>
    %16 = arith.maximumf %14, %15 : vector<2x128xf32>
    %17 = arith.subf %11, %16 : vector<2x128xf32>
    %18 = arith.mulf %8, %17 : vector<2x128xf32>
    %19 = arith.addf %16, %18 : vector<2x128xf32>
    %20 = arith.mulf %6, %8 : vector<2x128xf32>
    %21 = arith.addf %6, %8 : vector<2x128xf32>
    %c0_11 = arith.constant 0 : index
    %c0_12 = arith.constant 0 : index
    %22 = vector.load %arg6[%c0_11, %c0_12] : memref<2x128xf32, #tpu.memory_space<vmem>>, vector<2x128xf32>
    %23 = arith.addf %22, %19 : vector<2x128xf32>
    %c0_13 = arith.constant 0 : index
    %c0_14 = arith.constant 0 : index
    %24 = vector.load %arg6[%c0_13, %c0_14] : memref<2x128xf32, #tpu.memory_space<vmem>>, vector<2x128xf32>
    tpu.vector_store %arg6[%c0_13, %c0_14], %23 {strides = array<i32>} : memref<2x128xf32, #tpu.memory_space<vmem>>, vector<2x128xf32>,
    %c0_15 = arith.constant 0 : index
    %c0_16 = arith.constant 0 : index
    %25 = vector.load %arg7[%c0_15, %c0_16] : memref<2x128xf32, #tpu.memory_space<vmem>>, vector<2x128xf32>
    %26 = arith.addf %25, %20 : vector<2x128xf32>
    %c0_17 = arith.constant 0 : index
    %c0_18 = arith.constant 0 : index
    %27 = vector.load %arg7[%c0_17, %c0_18] : memref<2x128xf32, #tpu.memory_space<vmem>>, vector<2x128xf32>
    tpu.vector_store %arg7[%c0_17, %c0_18], %26 {strides = array<i32>} : memref<2x128xf32, #tpu.memory_space<vmem>>, vector<2x128xf32>,
    %c0_19 = arith.constant 0 : index
    %c0_20 = arith.constant 0 : index
    %28 = vector.load %arg8[%c0_19, %c0_20] : memref<2x128xf32, #tpu.memory_space<vmem>>, vector<2x128xf32>
    %29 = arith.addf %28, %21 : vector<2x128xf32>
    %c0_21 = arith.constant 0 : index
    %c0_22 = arith.constant 0 : index
    %30 = vector.load %arg8[%c0_21, %c0_22] : memref<2x128xf32, #tpu.memory_space<vmem>>, vector<2x128xf32>
    tpu.vector_store %arg8[%c0_21, %c0_22], %29 {strides = array<i32>} : memref<2x128xf32, #tpu.memory_space<vmem>>, vector<2x128xf32>,
    %c1_i32 = arith.constant 1 : i32
    %31 = arith.cmpi eq, %arg1, %c1_i32 : i32
    %c0_i32_23 = arith.constant 0 : i32
    %32 = arith.cmpi eq, %arg2, %c0_i32_23 : i32
    %33 = arith.andi %31, %32 : i1
    %34 = arith.extui %33 : i1 to i32
    %c0_i32_24 = arith.constant 0 : i32
    %35 = arith.cmpi ne, %34, %c0_i32_24 : i32
    scf.if %35 {
      %c0_25 = arith.constant 0 : index
      %c0_26 = arith.constant 0 : index
      %36 = vector.load %arg6[%c0_25, %c0_26] : memref<2x128xf32, #tpu.memory_space<vmem>>, vector<2x128xf32>
      %37 = vector.shape_cast %36 : vector<2x128xf32> to vector<1x2x128xf32>
      %cst_27 = arith.constant dense<0.000000e+00> : vector<1xf32>
      %38 = vector.multi_reduction <add>, %37, %cst_27 [1, 2] : vector<1x2x128xf32> to vector<1xf32>
      %39 = vector.shape_cast %38 : vector<1xf32> to vector<1x1x1xf32>
      %40 = vector.extract %39[0, 0, 0] : f32 from vector<1x1x1xf32>
      %cst_28 = arith.constant 0.000000e+00 : f32
      %41 = arith.subf %cst_28, %40 : f32
      %cst_29 = arith.constant 5.120000e+02 : f32
      %42 = arith.divf %41, %cst_29 : f32
      %c0_30 = arith.constant 0 : index
      %c0_31 = arith.constant 0 : index
      %43 = vector.load %arg7[%c0_30, %c0_31] : memref<2x128xf32, #tpu.memory_space<vmem>>, vector<2x128xf32>
      %44 = vector.shape_cast %43 : vector<2x128xf32> to vector<1x2x128xf32>
      %cst_32 = arith.constant dense<0.000000e+00> : vector<1xf32>
      %45 = vector.multi_reduction <add>, %44, %cst_32 [1, 2] : vector<1x2x128xf32> to vector<1xf32>
      %46 = vector.shape_cast %45 : vector<1xf32> to vector<1x1x1xf32>
      %47 = vector.extract %46[0, 0, 0] : f32 from vector<1x1x1xf32>
      %c0_33 = arith.constant 0 : index
      %c0_34 = arith.constant 0 : index
      %48 = vector.load %arg8[%c0_33, %c0_34] : memref<2x128xf32, #tpu.memory_space<vmem>>, vector<2x128xf32>
      %49 = vector.shape_cast %48 : vector<2x128xf32> to vector<1x2x128xf32>
      %cst_35 = arith.constant dense<0.000000e+00> : vector<1xf32>
      %50 = vector.multi_reduction <add>, %49, %cst_35 [1, 2] : vector<1x2x128xf32> to vector<1xf32>
      %51 = vector.shape_cast %50 : vector<1xf32> to vector<1x1x1xf32>
      %52 = vector.extract %51[0, 0, 0] : f32 from vector<1x1x1xf32>
      %cst_36 = arith.constant 2.000000e+00 : f32
      %53 = arith.mulf %cst_36, %47 : f32
      %cst_37 = arith.constant 1.000000e+00 : f32
      %54 = arith.addf %53, %cst_37 : f32
      %cst_38 = arith.constant 1.000000e+00 : f32
      %55 = arith.addf %52, %cst_38 : f32
      %56 = arith.divf %54, %55 : f32
      %cst_39 = arith.constant 1.000000e+00 : f32
      %57 = arith.subf %cst_39, %56 : f32
      %58 = arith.addf %42, %57 : f32
      %59 = vector.broadcast %58 : f32 to vector<1x8x128xf32>
      %c0_40 = arith.constant 0 : index
      %c0_41 = arith.constant 0 : index
      %c0_42 = arith.constant 0 : index
      %60 = vector.load %arg5[%c0_40, %c0_41, %c0_42] : memref<1x8x128xf32, #tpu.memory_space<vmem>>, vector<1x8x128xf32>
      tpu.vector_store %arg5[%c0_40, %c0_41, %c0_42], %59 {strides = array<i32>} : memref<1x8x128xf32, #tpu.memory_space<vmem>>, vector<1x8x128xf32>,
    } else {
    }
    return
  }
  func.func @transform_0(%arg0: i32, %arg1: i32, %arg2: i32) -> (i32, i32, i32, i32) {
    %c0_i32 = arith.constant 0 : i32
    %c0_i32_0 = arith.constant 0 : i32
    return %arg1, %arg0, %arg2, %c0_i32 : i32, i32, i32, i32
  }
  func.func @transform_1(%arg0: i32, %arg1: i32, %arg2: i32) -> (i32, i32, i32, i32) {
    %c0_i32 = arith.constant 0 : i32
    %c0_i32_0 = arith.constant 0 : i32
    return %arg1, %arg0, %arg2, %c0_i32 : i32, i32, i32, i32
  }
  func.func @transform_2(%arg0: i32, %arg1: i32, %arg2: i32) -> (i32, i32, i32) {
    %c0_i32 = arith.constant 0 : i32
    %c0_i32_0 = arith.constant 0 : i32
    %c0_i32_1 = arith.constant 0 : i32
    return %arg0, %c0_i32, %c0_i32_0 : i32, i32, i32
  }
}

</mosaic_0001>

<llo_original>
// kernel: tpu_custom_call.1
$region0: #{tpu_custom_call.1}
  #allocation0 [shape = 'u32[]', space=smem, size = 0x4, offset = 0x4, fixed_abs, tag = 'smem constant byte address 0x4 - core index']
  #allocation1 [shape = 'u32[72,128]{1,0:T(1,128)}', space=vmem, size = 0x9000, scoped, tag = 'internal scratch']
  #allocation2 [shape = 'f32[2,128]{1,0:T(2,128)}', space=vmem, size = 0x400, scoped, tag = 'scratch operand']
  #allocation3 [shape = 'f32[2,128]{1,0:T(2,128)}', space=vmem, size = 0x400, scoped, tag = 'scratch operand']
  #allocation4 [shape = 'f32[2,128]{1,0:T(2,128)}', space=vmem, size = 0x400, scoped, tag = 'scratch operand']
  %s0 = inlined_call_operand.hbm [shape: f32[2,4,2,128], index: 0, kind: input, shape index: {}]
  %s1 = inlined_call_operand.hbm [shape: f32[2,4,2,128], index: 1, kind: input, shape index: {}]
  %s2 = inlined_call_operand.hbm [shape: f32[4,8,128], index: 2, kind: output, shape index: {}]
  %s3 = sld [smem:[#allocation0]]
  $region57: #{tpu_custom_call.1} parent=0
    _
  %s5 = ssub.s32 1, %s3
  %s6 = scalar_select 0, %s5, %s3
  $region1: #{tpu_custom_call.1} parent=0
    #allocation5 [shape = 'u8[2048]{0}', space=vmem, size = 0x800, scoped, tag = 'input window, operand 0']
    #allocation6 [shape = 's32[2]{0}', space=sflag, size = 0x8, scoped, tag = 'scoped memory for tpu_custom_call.1']
    #allocation7 [shape = 's32[2]{0}', space=sflag, size = 0x8, scoped, tag = 'scoped memory for tpu_custom_call.1']
    #allocation8 [shape = 'u8[2048]{0}', space=vmem, size = 0x800, scoped, tag = 'input window, operand 1']
    #allocation9 [shape = 's32[2]{0}', space=sflag, size = 0x8, scoped, tag = 'scoped memory for tpu_custom_call.1']
    #allocation10 [shape = 'u8[8192]{0}', space=vmem, size = 0x2000, scoped, tag = 'output window, operand 0']
    %7 = vsyncpa [#allocation6], 0
    %s8 = scalar_lea.sflag [#allocation6], 1
    %9 = vsyncpa %s8, 0
    %10 = vsyncpa [#allocation9], 0
    %s11 = scalar_lea.sflag [#allocation9], 1
    %12 = vsyncpa %s11, 0
    %13 = vsyncpa [#allocation7], 0
    %s14 = scalar_lea.sflag [#allocation7], 1
    %15 = vsyncpa %s14, 0
    loop: start=0, step=1, limit=10
    $region2: #{tpu_custom_call.1} parent=1 // loop_pre_header
      _
    $region3: #{tpu_custom_call.1} parent=1 // loop_header
      %s17 = sphi 0, %s21
      %p18 = scmp.ge.s32.totalorder %s17, 10
      %s24 = sphi 0, %s43
      %s25 = sphi 0, %s39
      %s26 = sphi 0, %s35
      %s27 = sphi 0, %s24
      %s28 = sphi 0, %s25
      %s29 = sphi 0, %s26
      %s30 = sphi 0, %s27
      %s31 = sphi 0, %s28
      %s32 = sphi 0, %s29
      %s50 = sphi 0, %s52
      %s53 = sphi 0, %s50
      %s54 = sphi 0, %s53
      %s70 = sphi 0, %s54
      %s80 = sphi 0, %s82
      %s83 = sphi 0, %s80
      %s84 = sphi 0, %s83
      %s100 = sphi 0, %s84
      %s106 = sphi 0, %s108
      %s109 = sphi 0, %s106
      %s110 = sphi 0, %s109
      %s126 = sphi 0, %s110
    $region4: #{tpu_custom_call.1} parent=1 // loop_header_branch
      %20 = sbr.rel (%p18) target = $region8
    $region5: #{tpu_custom_call.1} parent=1 // loop_body
      %s22 = ssub.s32 %s17, 1
      %s23 = ssub.s32 %s17, 2
      %s33 = sadd.s32 1, %s26
      %p34 = scmp.ge.s32.totalorder %s33, 1
      %s35 = scalar_select %p34, 0, %s33
      %s36 = sadd.s32 1, %s25
      %s37 = scalar_select %p34, %s36, %s25
      %p38 = scmp.ge.s32.totalorder %s37, 2
      %s39 = scalar_select %p38, 0, %s37
      %s40 = sadd.s32 1, %s24
      %s41 = scalar_select %p38, %s40, %s24
      %p42 = scmp.ge.s32.totalorder %s41, 4
      %s43 = scalar_select %p42, 0, %s41
      %s44 = ssub.s32 %s25, %s39
      %s45 = ssub.s32 %s24, %s43
      %s46 = sor.u32 %s44, %s45
      %s47 = ssub.s32 %s26, %s35
      %s48 = sor.u32 %s46, %s47
      %p49 = scmp.eq.s32.totalorder %s48, 0
      %s51 = sadd.s32 %s50, 1
      %s52 = scalar_select %p49, %s50, %s51
      %p55 = pneg %p49
      %p56 = scmp.eq.s32.totalorder %s17, 7
      %p57 = por %p55, %p56
      %p58 = scmp.ne.s32.totalorder %s50, %s53
      %p59 = scmp.eq.s32.totalorder %s17, 0
      %p60 = por %p58, %p59
      %p61 = scmp.ne.s32.totalorder %s50, %s53
      %p62 = scmp.eq.s32.totalorder %s22, 7
      %p63 = por %p61, %p62
      %p64 = scmp.ne.s32.totalorder %s53, %s54
      %p65 = scmp.eq.s32.totalorder %s22, 0
      %p66 = por %p64, %p65
      %p67 = scmp.ne.s32.totalorder %s53, %s54
      %p68 = scmp.eq.s32.totalorder %s23, 7
      %p69 = por %p67, %p68
      %p71 = scmp.ne.s32.totalorder %s54, %s70
      %p72 = scmp.eq.s32.totalorder %s23, 0
      %p73 = por %p71, %p72
      %s74 = ssub.s32 %s25, %s39
      %s75 = ssub.s32 %s24, %s43
      %s76 = sor.u32 %s74, %s75
      %s77 = ssub.s32 %s26, %s35
      %s78 = sor.u32 %s76, %s77
      %p79 = scmp.eq.s32.totalorder %s78, 0
      %s81 = sadd.s32 %s80, 1
      %s82 = scalar_select %p79, %s80, %s81
      %p85 = pneg %p79
      %p86 = scmp.eq.s32.totalorder %s17, 7
      %p87 = por %p85, %p86
      %p88 = scmp.ne.s32.totalorder %s80, %s83
      %p89 = scmp.eq.s32.totalorder %s17, 0
      %p90 = por %p88, %p89
      %p91 = scmp.ne.s32.totalorder %s80, %s83
      %p92 = scmp.eq.s32.totalorder %s22, 7
      %p93 = por %p91, %p92
      %p94 = scmp.ne.s32.totalorder %s83, %s84
      %p95 = scmp.eq.s32.totalorder %s22, 0
      %p96 = por %p94, %p95
      %p97 = scmp.ne.s32.totalorder %s83, %s84
      %p98 = scmp.eq.s32.totalorder %s23, 7
      %p99 = por %p97, %p98
      %p101 = scmp.ne.s32.totalorder %s84, %s100
      %p102 = scmp.eq.s32.totalorder %s23, 0
      %p103 = por %p101, %p102
      %s104 = ssub.s32 %s24, %s43
      %p105 = scmp.eq.s32.totalorder %s104, 0
      %s107 = sadd.s32 %s106, 1
      %s108 = scalar_select %p105, %s106, %s107
      %p111 = pneg %p105
      %p112 = scmp.eq.s32.totalorder %s17, 7
      %p113 = por %p111, %p112
      %p114 = scmp.ne.s32.totalorder %s106, %s109
      %p115 = scmp.eq.s32.totalorder %s17, 0
      %p116 = por %p114, %p115
      %p117 = scmp.ne.s32.totalorder %s106, %s109
      %p118 = scmp.eq.s32.totalorder %s22, 7
      %p119 = por %p117, %p118
      %p120 = scmp.ne.s32.totalorder %s109, %s110
      %p121 = scmp.eq.s32.totalorder %s22, 0
      %p122 = por %p120, %p121
      %p123 = scmp.ne.s32.totalorder %s109, %s110
      %p124 = scmp.eq.s32.totalorder %s23, 7
      %p125 = por %p123, %p124
      %p127 = scmp.ne.s32.totalorder %s110, %s126
      %p128 = scmp.eq.s32.totalorder %s23, 0
      %p129 = por %p127, %p128
      %p130 = scmp.le.s32.totalorder 1, %s17
      %p131 = scmp.lt.s32.totalorder %s17, 9
      %p132 = pnand %p130, %p131
      %p133 = pneg %p132
      // Predicated region
      $region9: #{tpu_custom_call.1} parent=5 // pred_check
        _
      $region10: #{tpu_custom_call.1} parent=5 // pred_check_branch
        %135 = sbr.rel (%p132) target = $region12
      $region11: #{tpu_custom_call.1} parent=5 // pred_region
        %s136 = ssub.s32 %s17, 1
      $region12: #{tpu_custom_call.1} parent=5 // pred_fallthru
        _
      %p137 = scmp.lt.s32.totalorder %s17, 8
      // Predicated region
      $region13: #{tpu_custom_call.1} parent=5 // pred_check
        %p138 = pneg %p137
      $region14: #{tpu_custom_call.1} parent=5 // pred_check_branch
        %140 = sbr.rel (%p138) target = $region16
      $region15: #{tpu_custom_call.1} parent=5 // pred_region
        // Predicated region
        $region17: #{tpu_custom_call.1} parent=15 // pred_check
          %p141 = pneg %p60
        $region18: #{tpu_custom_call.1} parent=15 // pred_check_branch
          %143 = sbr.rel (%p141) target = $region20
        $region19: #{tpu_custom_call.1} parent=15 // pred_region
          %s144 = sand.u32 %s50, 1
          %s145 = scalar_lea.sflag [#allocation6], %s144
          %s146 = sand.u32 %s50, 1
          %s147 = smul.addr %s146, 2
          %s148 = scalar_lea.vmem [#allocation5], %s147
          %150 = vsyncadd %s145, 0
          %s151 = sadd.s32 %s26, %s24
          %s152 = smul.addr %s25, 4
          %s153 = sadd.s32 %s151, %s152
          %s154 = smul.addr %s153, 2
          %s155 = scalar_lea.hbm %s0, %s154
          %s157 = sshll.u32 %s155, 4
          %s158 = int_to_ptr.hbm [resolvable:$true] %s157
          %s159 = sshll.u32 %s148, 4
          %s160 = int_to_ptr.vmem [resolvable:$true] %s159
          %162 = dma.hbm_to_vmem [thread:$0]  %s158, 32, %s160, %s145
        $region20: #{tpu_custom_call.1} parent=15 // pred_fallthru
          _
        // Predicated region
        $region21: #{tpu_custom_call.1} parent=15 // pred_check
          %p163 = pneg %p90
        $region22: #{tpu_custom_call.1} parent=15 // pred_check_branch
          %165 = sbr.rel (%p163) target = $region24
        $region23: #{tpu_custom_call.1} parent=15 // pred_region
          %s166 = sand.u32 %s80, 1
          %s167 = scalar_lea.sflag [#allocation9], %s166
          %s168 = sand.u32 %s80, 1
          %s169 = smul.addr %s168, 2
          %s170 = scalar_lea.vmem [#allocation8], %s169
          %172 = vsyncadd %s167, 0
          %s173 = sadd.s32 %s26, %s24
          %s174 = smul.addr %s25, 4
          %s175 = sadd.s32 %s173, %s174
          %s176 = smul.addr %s175, 2
          %s177 = scalar_lea.hbm %s1, %s176
          %s179 = sshll.u32 %s177, 4
          %s180 = int_to_ptr.hbm [resolvable:$true] %s179
          %s181 = sshll.u32 %s170, 4
          %s182 = int_to_ptr.vmem [resolvable:$true] %s181
          %184 = dma.hbm_to_vmem [thread:$0]  %s180, 32, %s182, %s167
        $region24: #{tpu_custom_call.1} parent=15 // pred_fallthru
          _
      $region16: #{tpu_custom_call.1} parent=5 // pred_fallthru
        _
      %p185 = scmp.le.s32.totalorder 1, %s17
      %p186 = scmp.lt.s32.totalorder %s17, 9
      %p187 = pnand %p185, %p186
      %p188 = pneg %p187
      // Predicated region
      $region25: #{tpu_custom_call.1} parent=5 // pred_check
        _
      $region26: #{tpu_custom_call.1} parent=5 // pred_check_branch
        %190 = sbr.rel (%p187) target = $region28
      $region27: #{tpu_custom_call.1} parent=5 // pred_region
        %s191 = ssub.s32 %s17, 1
        %s192 = sand.u32 %s53, 1
        %s193 = scalar_lea.sflag [#allocation6], %s192
        %s194 = sand.u32 %s53, 1
        %s195 = smul.addr %s194, 2
        %s196 = scalar_lea.vmem [#allocation5], %s195
        // Predicated region
        $region29: #{tpu_custom_call.1} parent=27 // pred_check
          %p197 = pneg %p66
        $region30: #{tpu_custom_call.1} parent=27 // pred_check_branch
          %199 = sbr.rel (%p197) target = $region32
        $region31: #{tpu_custom_call.1} parent=27 // pred_region
          %201 = dma.done %s193, 32
        $region32: #{tpu_custom_call.1} parent=27 // pred_fallthru
          _
        %s202 = sand.u32 %s83, 1
        %s203 = scalar_lea.sflag [#allocation9], %s202
        %s204 = sand.u32 %s83, 1
        %s205 = smul.addr %s204, 2
        %s206 = scalar_lea.vmem [#allocation8], %s205
        // Predicated region
        $region33: #{tpu_custom_call.1} parent=27 // pred_check
          %p207 = pneg %p96
        $region34: #{tpu_custom_call.1} parent=27 // pred_check_branch
          %209 = sbr.rel (%p207) target = $region36
        $region35: #{tpu_custom_call.1} parent=27 // pred_region
          %211 = dma.done %s203, 32
        $region36: #{tpu_custom_call.1} parent=27 // pred_fallthru
          _
        %s212 = sand.u32 %s53, 1
        %s213 = scalar_lea.sflag [#allocation6], %s212
        %s214 = sand.u32 %s53, 1
        %s215 = smul.addr %s214, 2
        %s216 = scalar_lea.vmem [#allocation5], %s215
        %p217 = pneg %p66
        %p218 = pneg %p63
        %s219 = sand.u32 %s83, 1
        %s220 = scalar_lea.sflag [#allocation9], %s219
        %s221 = sand.u32 %s83, 1
        %s222 = smul.addr %s221, 2
        %s223 = scalar_lea.vmem [#allocation8], %s222
        %p224 = pneg %p96
        %p225 = pneg %p93
        %p226 = pneg %p122
        %p227 = pneg %p119
        %s228 = sand.u32 %s109, 1
        %s229 = scalar_lea.sflag [#allocation7], %s228
        %s230 = sand.u32 %s109, 1
        %s231 = smul.addr %s230, 8
        %s232 = scalar_lea.vmem [#allocation10], %s231
        %p233 = scmp.eq.s32.totalorder %s28, 0
        %p234 = scmp.eq.s32.totalorder %s29, 0
        %p235 = pnand %p233, %p234
        %p236 = pneg %p235
        // Predicated region
        $region37: #{tpu_custom_call.1} parent=27 // pred_check
          _
        $region38: #{tpu_custom_call.1} parent=27 // pred_check_branch
          %238 = sbr.rel (%p235) target = $region40
        $region39: #{tpu_custom_call.1} parent=27 // pred_region
          %239 = vst [vmem:[#allocation2] sm:$0x3] 0.0
          %240 = vst [vmem:[#allocation3] sm:$0x3] 0.0
          %241 = vst [vmem:[#allocation4] sm:$0x3] 0.0
        $region40: #{tpu_custom_call.1} parent=27 // pred_fallthru
          _
        %v242 = vld [vmem:[%s196] sm:$0x3]
        %v243 = vld [vmem:[%s206] sm:$0x3]
        %v244 = vlog2.pop %v242
        %v245 = vmul.f32 %v244, 0.6931472
        %v246 = vmax.f32 %v245, -100.0
        %v247 = vsub.f32 1.0, %v242
        %v248 = vlog2.pop %v247
        %v249 = vmul.f32 %v248, 0.6931472
        %v250 = vmax.f32 %v249, -100.0
        %v251 = vsub.f32 %v246, %v250
        %v252 = vmul.f32 %v243, %v251
        %v253 = vadd.f32 %v250, %v252
        %v254 = vmul.f32 %v242, %v243
        %v255 = vadd.f32 %v242, %v243
        %v256 = vld [vmem:[#allocation2] sm:$0x3]
        %v257 = vadd.f32 %v256, %v253
        %258 = vst [vmem:[#allocation2] sm:$0x3] %v257
        %v259 = vld [vmem:[#allocation3] sm:$0x3]
        %v260 = vadd.f32 %v259, %v254
        %261 = vst [vmem:[#allocation3] sm:$0x3] %v260
        %v262 = vld [vmem:[#allocation4] sm:$0x3]
        %v263 = vadd.f32 %v262, %v255
        %264 = vst [vmem:[#allocation4] sm:$0x3] %v263
        %p265 = scmp.eq.s32.totalorder %s28, 1
        %p266 = pnand %p265, %p234
        %p267 = pneg %p266
        // Predicated region
        $region41: #{tpu_custom_call.1} parent=27 // pred_check
          _
        $region42: #{tpu_custom_call.1} parent=27 // pred_check_branch
          %269 = sbr.rel (%p266) target = $region44
        $region43: #{tpu_custom_call.1} parent=27 // pred_region
          %v270 = vld [vmem:[#allocation2] sm:$0x3]
          %vm271 = vcmask 1041408
          %v272 = vsel %vm271, %v270, 0.0
          %273 = vadd.xlane.f32.xlu0 %v272
          %v274 = vpop.xlane.xlu0 %273
          %v275 = vrot.slane %v274, 4
          %v276 = vadd.f32 %v274, %v275
          %v277 = vrot.slane %v276, 2
          %v278 = vadd.f32 %v276, %v277
          %v279 = vrot.slane %v278, 1
          %v280 = vadd.f32 %v278, %v279
          %s281 = vtos %v280
          %s282 = ssub.f32 0.0, %s281
          %v283 = vrcp.pop 512.0
          %v284 = vmul.f32 512.0, %v283
          %v285 = vsub.f32 1.0, %v284
          %v286 = vmul.f32 %v283, %v285
          %v287 = vadd.f32 %v283, %v286
          %vm288 = vweird.f32 %v283
          %v289 = vsel %vm288, %v283, %v287
          %s290 = vtos %v289
          %s291 = smul.f32 %s282, %s290
          %v292 = vld [vmem:[#allocation3] sm:$0x3]
          %v293 = vsel %vm271, %v292, 0.0
          %294 = vadd.xlane.f32.xlu0 %v293
          %v295 = vpop.xlane.xlu0 %294
          %v296 = vrot.slane %v295, 4
          %v297 = vadd.f32 %v295, %v296
          %v298 = vrot.slane %v297, 2
          %v299 = vadd.f32 %v297, %v298
          %v300 = vrot.slane %v299, 1
          %v301 = vadd.f32 %v299, %v300
          %s302 = vtos %v301
          %v303 = vld [vmem:[#allocation4] sm:$0x3]
          %v304 = vsel %vm271, %v303, 0.0
          %305 = vadd.xlane.f32.xlu0 %v304
          %v306 = vpop.xlane.xlu0 %305
          %v307 = vrot.slane %v306, 4
          %v308 = vadd.f32 %v306, %v307
          %v309 = vrot.slane %v308, 2
          %v310 = vadd.f32 %v308, %v309
          %v311 = vrot.slane %v310, 1
          %v312 = vadd.f32 %v310, %v311
          %s313 = vtos %v312
          %s314 = smul.f32 %s302, 2.0
          %s315 = sadd.f32 %s314, 1.0
          %s316 = sadd.f32 %s313, 1.0
          %v317 = vstv %s316
          %v318 = vrcp.pop %v317
          %v319 = vmul.f32 %v317, %v318
          %v320 = vsub.f32 1.0, %v319
          %v321 = vmul.f32 %v318, %v320
          %v322 = vadd.f32 %v318, %v321
          %vm323 = vweird.f32 %v317
          %vm324 = vweird.f32 %v318
          %vm325 = vmor %vm323, %vm324
          %v326 = vsel %vm325, %v318, %v322
          %v327 = vand.u32 2147483647, %v317
          %vm328 = vcmp.eq.f32.partialorder %v327, 8.507059e+37
          %v329 = vand.u32 %v317, 2147483648
          %v330 = vor.u32 1.1754944e-38, %v329
          %v331 = vsel %vm328, %v330, %v326
          %s332 = vtos %v331
          %s333 = smul.f32 %s315, %s332
          %s334 = ssub.f32 1.0, %s333
          %s335 = sadd.f32 %s291, %s334
          %v336 = vstv %s335
          %337 = vst [vmem:[%s232] sm:$0xff] %v336
        $region44: #{tpu_custom_call.1} parent=27 // pred_fallthru
          _
        %s338 = sand.u32 %s109, 1
        %s339 = scalar_lea.sflag [#allocation7], %s338
        %s340 = sand.u32 %s109, 1
        %s341 = smul.addr %s340, 8
        %s342 = scalar_lea.vmem [#allocation10], %s341
        // Predicated region
        $region45: #{tpu_custom_call.1} parent=27 // pred_check
          %p343 = pneg %p119
        $region46: #{tpu_custom_call.1} parent=27 // pred_check_branch
          %345 = sbr.rel (%p343) target = $region48
        $region47: #{tpu_custom_call.1} parent=27 // pred_region
          %347 = vsyncadd %s339, 0
          %s348 = smul.addr %s27, 8
          %s349 = scalar_lea.hbm %s2, %s348
          %s351 = sshll.u32 %s342, 4
          %s352 = int_to_ptr.vmem [resolvable:$true] %s351
          %s353 = sshll.u32 %s349, 4
          %s354 = int_to_ptr.hbm [resolvable:$true] %s353
          %356 = dma.vmem_to_hbm [thread:$0]  %s352, 128, %s354, %s339
        $region48: #{tpu_custom_call.1} parent=27 // pred_fallthru
          _
      $region28: #{tpu_custom_call.1} parent=5 // pred_fallthru
        _
      %p357 = scmp.le.s32.totalorder 2, %s17
      // Predicated region
      $region49: #{tpu_custom_call.1} parent=5 // pred_check
        %p358 = pneg %p357
      $region50: #{tpu_custom_call.1} parent=5 // pred_check_branch
        %360 = sbr.rel (%p358) target = $region52
      $region51: #{tpu_custom_call.1} parent=5 // pred_region
        %s361 = ssub.s32 %s17, 2
        // Predicated region
        $region53: #{tpu_custom_call.1} parent=51 // pred_check
          %p362 = pneg %p125
        $region54: #{tpu_custom_call.1} parent=51 // pred_check_branch
          %364 = sbr.rel (%p362) target = $region56
        $region55: #{tpu_custom_call.1} parent=51 // pred_region
          %s365 = sand.u32 %s110, 1
          %s366 = scalar_lea.sflag [#allocation7], %s365
          %s367 = sand.u32 %s110, 1
          %s368 = smul.addr %s367, 8
          %s369 = scalar_lea.vmem [#allocation10], %s368
          %371 = dma.done %s366, 128
        $region56: #{tpu_custom_call.1} parent=51 // pred_fallthru
          _
      $region52: #{tpu_custom_call.1} parent=5 // pred_fallthru
        _
    $region6: #{tpu_custom_call.1} parent=1 // loop_footer
      %s21 = sadd.s32 1, %s17
    $region7: #{tpu_custom_call.1} parent=1 // loop_footer_branch
      %16 = sbr.rel target = $region3
    $region8: #{tpu_custom_call.1} parent=1 // loop_exit
      _
    %372 = vsyncpa [#allocation6], 1
    %s373 = scalar_lea.sflag [#allocation6], 1
    %374 = vsyncpa %s373, 1
    %375 = vsyncpa [#allocation9], 1
    %s376 = scalar_lea.sflag [#allocation9], 1
    %377 = vsyncpa %s376, 1
    %378 = vsyncpa [#allocation7], 1
    %s379 = scalar_lea.sflag [#allocation7], 1
    %380 = vsyncpa %s379, 1

</llo_original>
